<compile_context>
chip_gen: v6e
topology: v6e:2x2x1
jax: 0.10.0
libtpu: 0.0.40
codegen_flags: <defaults>
</compile_context>

<pallas_src>
import functools

import jax
import jax.numpy as jnp
from jax.experimental import pallas as pl
from jax.experimental.pallas import tpu as pltpu

_INV_LN2 = 1.4426950408889634  # 1 / ln(2)  (torch.log2 semantics)


def _round_up(x, m):
    return ((x + m - 1) // m) * m


def _vmem_limit_bytes():
    """Per-generation VMEM limit (leave headroom below physical capacity)."""
    cap = 64 * 1024 * 1024  # conservative fallback (v7x per-TC capacity)
    try:
        info = pltpu.get_tpu_info()
        c = getattr(info, "vmem_capacity_bytes", None)
        if c:
            cap = int(c)
    except Exception:
        pass
    # 3/4 of capacity, capped: 96 MiB on 128 MiB parts (v5e/v6e), 48 MiB on v7x.
    return min((cap * 3) // 4, 96 * 1024 * 1024)


def _focal_loss_kernel(probs_ref, target_ref, out_ref, acc_ref, *, gamma):
    i = pl.program_id(1)          # row-block (arbitrary/accumulator) axis

    @pl.when(i == 0)
    def _():
        acc_ref[...] = jnp.zeros_like(acc_ref)

    p = probs_ref[...]            # (TM, C) float32
    tgt = target_ref[...]         # (TM, 1) int32; padded/phantom rows hold -1

    # Lane-dense elementwise loss on the whole (TM, C) tile: one compare +
    # one select per element, no lane-sparse (TM, 1) intermediates.
    col = jax.lax.broadcasted_iota(jnp.int32, p.shape, 1)
    logp = jnp.log(p)             # natural log; 1/ln2 scale applied in wrapper

    if gamma == 2:
        w = jnp.square(1.0 - p)   # two cheap VPU ops, no pow
    elif gamma == 1:
        w = 1.0 - p
    elif gamma == 0:
        w = None
    else:
        w = (1.0 - p) ** gamma
    val = logp if w is None else w * logp

    # SELECT (not multiply-by-mask): rows whose target is -1 (tail padding /
    # phantom duplicate blocks) match no column, so any NaN/-inf computed from
    # garbage tail probs is discarded here and never reaches the accumulator.
    contrib = jnp.where(col == tgt, val, 0.0)
    acc_ref[...] += jnp.sum(contrib)

    @pl.when(i == pl.num_programs(1) - 1)
    def _():
        # Lane/sublane-aligned (8,128) partial-sum block for this group.
        out_ref[...] = jnp.broadcast_to(acc_ref[...], out_ref.shape)


def focal_loss(probs, target, gamma=2, reduction="mean",
               block_rows=None, num_partials=2):
    """probs: (N, C) float32; target: (N,) or (N, 1) integer class ids."""
    if reduction not in ("mean", "sum"):
        # TODO(synk): PyTorch returns None for unknown reduction; no tensor
        # equivalent here, so raise at trace time instead.
        raise ValueError(f"unsupported reduction: {reduction!r}")

    probs = probs.astype(jnp.float32)
    N, C = probs.shape
    tgt_flat = jnp.reshape(target, (-1,)).astype(jnp.int32)
    assert tgt_flat.shape[0] == N

    vmem_limit = _vmem_limit_bytes()

    # VMEM bytes per row, per buffer: C floats of probs + the 128-lane-padded
    # (tm, 1) int32 target row (512 B).  Double-buffered by BlockSpec.
    row_bytes = C * 4 + 128 * 4
    if block_rows is None:
        budget = vmem_limit - 2 * 1024 * 1024        # slack for out/scratch
        tm = max(8, budget // (2 * row_bytes))
    else:
        tm = block_rows
    tm = min(tm, _round_up(N, 8))
    tm = max(8, (tm // 8) * 8)

    total_blocks = pl.cdiv(N, tm)
    # Pad the block count up to a multiple of the group count so the leading
    # "parallel" axis always engages both TensorCores on v7x (harmless extra
    # loop level on single-TC v5e/v6e; pass num_partials=1 to drop it).
    g = max(1, min(int(num_partials), total_blocks))
    bpg = pl.cdiv(total_blocks, g)
    padded_rows = g * bpg * tm

    # Pad ONLY the target (O(N) int32, never the (N, C) probs) with -1 so
    # padded tail rows and phantom duplicate blocks contribute exactly 0.
    tgt_padded = jnp.pad(tgt_flat, (0, padded_rows - N),
                         constant_values=-1).reshape(padded_rows, 1)

    last_block = total_blocks - 1      # clamp probs index for phantom blocks
    kernel = functools.partial(_focal_loss_kernel, gamma=gamma)

    out = pl.pallas_call(
        kernel,
        out_shape=jax.ShapeDtypeStruct((g * 8, 128), jnp.float32),
        grid_spec=pltpu.PrefetchScalarGridSpec(
            num_scalar_prefetch=0,
            grid=(g, bpg),
            in_specs=[
                pl.BlockSpec(
                    (tm, C),
                    lambda c, i: (jnp.minimum(c * bpg + i, last_block), 0)),
                pl.BlockSpec((tm, 1), lambda c, i: (c * bpg + i, 0)),
            ],
            out_specs=pl.BlockSpec((8, 128), lambda c, i: (c, 0)),
            scratch_shapes=[pltpu.VMEM((1, 1), jnp.float32)],
        ),
        compiler_params=pltpu.CompilerParams(
            dimension_semantics=("parallel", "arbitrary"),
            vmem_limit_bytes=vmem_limit,
        ),
    )(probs, tgt_padded)

    partials = out[0::8, 0]                   # (g,) per-group partial sums
    total = -_INV_LN2 * jnp.sum(partials)     # -(1-Pt)^g * log2(Pt), summed
    if reduction == "mean":
        return total / jnp.float32(N)         # divide by the TRUE N
    return total


def _focal_loss_ref(probs, target, gamma=2, reduction="mean"):
    tgt = jnp.reshape(target, (-1,))
    pt = probs[jnp.arange(probs.shape[0]), tgt]
    loss = -((1.0 - pt) ** gamma) * (jnp.log(pt) * _INV_LN2)
    return jnp.mean(loss) if reduction == "mean" else jnp.sum(loss)


if __name__ == "__main__":
    key = jax.random.PRNGKey(0)
    k_logits, k_tgt = jax.random.split(key)

    # Small but multi-tile: N=250, block_rows=56 -> 5 row blocks, 2 groups of 3
    # (one phantom clamped block) and a padded partial last tile.
    N, C = 250, 32
    logits = jax.random.normal(k_logits, (N, C), dtype=jnp.float32)
    probs = jax.nn.softmax(logits, axis=-1)                 # valid probabilities
    target = jax.random.randint(k_tgt, (N, 1), 0, C, dtype=jnp.int32)

    out_mean = focal_loss(probs, target, gamma=2, reduction="mean",
                          block_rows=56, num_partials=2)
    out_mean = jax.block_until_ready(out_mean)
    ref_mean = _focal_loss_ref(probs, target, gamma=2, reduction="mean")
    assert jnp.allclose(out_mean, ref_mean, rtol=1e-5, atol=1e-5), (
        out_mean, ref_mean)

    # Auto tile sizing (single block, g collapses to 1) + sum reduction.
    out_sum = focal_loss(probs, target, gamma=2, reduction="sum")
    out_sum = jax.block_until_ready(out_sum)
    ref_sum = _focal_loss_ref(probs, target, gamma=2, reduction="sum")
    assert jnp.allclose(out_sum, ref_sum, rtol=1e-5, atol=1e-4), (
        out_sum, ref_sum)

    print("KERNEL_OK")
</pallas_src>

<mosaic_0001>
module attributes {stable_mosaic.version = 11 : i64} {
  func.func @_focal_loss_kernel(%arg0: i32, %arg1: i32, %arg2: memref<56x32xf32, #tpu.memory_space<vmem>>, %arg3: memref<56x1xi32, #tpu.memory_space<vmem>>, %arg4: memref<8x128xf32, #tpu.memory_space<vmem>>, %arg5: memref<1x1xf32, #tpu.memory_space<vmem>>) attributes {dimension_semantics = [#tpu.dimension_semantics<parallel>, #tpu.dimension_semantics<arbitrary>], iteration_bounds = array<i64: 2, 3>, scalar_prefetch = 0 : i64, scratch_operands = 1 : i64, tpu.core_type = #tpu.core_type<tc>, window_params = [{transform_indices = @transform_0, window_bounds = array<i64: 56, 32>}, {transform_indices = @transform_1, window_bounds = array<i64: 56, 1>}, {transform_indices = @transform_2, window_bounds = array<i64: 8, 128>}]} {
    %c0_i32 = arith.constant 0 : i32
    %0 = arith.cmpi eq, %arg1, %c0_i32 : i32
    %1 = arith.extui %0 : i1 to i32
    %c0_i32_0 = arith.constant 0 : i32
    %2 = arith.cmpi ne, %1, %c0_i32_0 : i32
    scf.if %2 {
      %cst_11 = arith.constant 0.000000e+00 : f32
      %26 = vector.broadcast %cst_11 : f32 to vector<1x1xf32>
      %c0_12 = arith.constant 0 : index
      %c0_13 = arith.constant 0 : index
      %27 = vector.load %arg5[%c0_12, %c0_13] : memref<1x1xf32, #tpu.memory_space<vmem>>, vector<1x1xf32>
      tpu.vector_store %arg5[%c0_12, %c0_13], %26 {strides = array<i32>} : memref<1x1xf32, #tpu.memory_space<vmem>>, vector<1x1xf32>,
    } else {
    }
    %c0 = arith.constant 0 : index
    %c0_1 = arith.constant 0 : index
    %3 = vector.load %arg2[%c0, %c0_1] : memref<56x32xf32, #tpu.memory_space<vmem>>, vector<56x32xf32>
    %c0_2 = arith.constant 0 : index
    %c0_3 = arith.constant 0 : index
    %4 = vector.load %arg3[%c0_2, %c0_3] : memref<56x1xi32, #tpu.memory_space<vmem>>, vector<56x1xi32>
    %5 = tpu.iota {dimensions = array<i32: 1>} : vector<56x32xi32>
    %6 = math.log %3 : vector<56x32xf32>
    %cst = arith.constant 1.000000e+00 : f32
    %7 = vector.broadcast %cst : f32 to vector<56x32xf32>
    %8 = arith.subf %7, %3 : vector<56x32xf32>
    %9 = arith.mulf %8, %8 : vector<56x32xf32>
    %10 = arith.mulf %9, %6 : vector<56x32xf32>
    %11 = vector.broadcast %4 : vector<56x1xi32> to vector<56x32xi32>
    %12 = arith.cmpi eq, %5, %11 : vector<56x32xi32>
    %cst_4 = arith.constant 0.000000e+00 : f32
    %13 = vector.broadcast %cst_4 : f32 to vector<56x32xf32>
    %14 = arith.select %12, %10, %13 : vector<56x32xi1>, vector<56x32xf32>
    %c0_5 = arith.constant 0 : index
    %c0_6 = arith.constant 0 : index
    %15 = vector.load %arg5[%c0_5, %c0_6] : memref<1x1xf32, #tpu.memory_space<vmem>>, vector<1x1xf32>
    %16 = vector.shape_cast %14 : vector<56x32xf32> to vector<1x56x32xf32>
    %cst_7 = arith.constant dense<0.000000e+00> : vector<1xf32>
    %17 = vector.multi_reduction <add>, %16, %cst_7 [1, 2] : vector<1x56x32xf32> to vector<1xf32>
    %18 = vector.shape_cast %17 : vector<1xf32> to vector<1x1x1xf32>
    %19 = vector.extract %18[0, 0, 0] : f32 from vector<1x1x1xf32>
    %20 = vector.broadcast %19 : f32 to vector<1x1xf32>
    %21 = arith.addf %15, %20 : vector<1x1xf32>
    %c0_8 = arith.constant 0 : index
    %c0_9 = arith.constant 0 : index
    %22 = vector.load %arg5[%c0_8, %c0_9] : memref<1x1xf32, #tpu.memory_space<vmem>>, vector<1x1xf32>
    tpu.vector_store %arg5[%c0_8, %c0_9], %21 {strides = array<i32>} : memref<1x1xf32, #tpu.memory_space<vmem>>, vector<1x1xf32>,
    %c2_i32 = arith.constant 2 : i32
    %23 = arith.cmpi eq, %arg1, %c2_i32 : i32
    %24 = arith.extui %23 : i1 to i32
    %c0_i32_10 = arith.constant 0 : i32
    %25 = arith.cmpi ne, %24, %c0_i32_10 : i32
    scf.if %25 {
      %c0_11 = arith.constant 0 : index
      %c0_12 = arith.constant 0 : index
      %26 = vector.load %arg5[%c0_11, %c0_12] : memref<1x1xf32, #tpu.memory_space<vmem>>, vector<1x1xf32>
      %27 = vector.shape_cast %26 : vector<1x1xf32> to vector<1x1xf32>
      %28 = vector.broadcast %27 : vector<1x1xf32> to vector<8x128xf32>
      %c0_13 = arith.constant 0 : index
      %c0_14 = arith.constant 0 : index
      %29 = vector.load %arg4[%c0_13, %c0_14] : memref<8x128xf32, #tpu.memory_space<vmem>>, vector<8x128xf32>
      tpu.vector_store %arg4[%c0_13, %c0_14], %28 {strides = array<i32>} : memref<8x128xf32, #tpu.memory_space<vmem>>, vector<8x128xf32>,
    } else {
    }
    return
  }
  func.func @transform_0(%arg0: i32, %arg1: i32) -> (i32, i32) {
    %c3_i32 = arith.constant 3 : i32
    %0 = arith.muli %arg0, %c3_i32 : i32
    %1 = arith.addi %0, %arg1 : i32
    %c4_i32 = arith.constant 4 : i32
    %2 = arith.minsi %1, %c4_i32 : i32
    %c0_i32 = arith.constant 0 : i32
    %c0_i32_0 = arith.constant 0 : i32
    return %2, %c0_i32 : i32, i32
  }
  func.func @transform_1(%arg0: i32, %arg1: i32) -> (i32, i32) {
    %c3_i32 = arith.constant 3 : i32
    %0 = arith.muli %arg0, %c3_i32 : i32
    %1 = arith.addi %0, %arg1 : i32
    %c0_i32 = arith.constant 0 : i32
    %c0_i32_0 = arith.constant 0 : i32
    return %1, %c0_i32 : i32, i32
  }
  func.func @transform_2(%arg0: i32, %arg1: i32) -> (i32, i32) {
    %c0_i32 = arith.constant 0 : i32
    %c0_i32_0 = arith.constant 0 : i32
    return %arg0, %c0_i32 : i32, i32
  }
}

</mosaic_0001>

<llo_original>
// kernel: tpu_custom_call.1
$region0: #{tpu_custom_call.1}
  #allocation0 [shape = 'u32[]', space=smem, size = 0x4, offset = 0x4, fixed_abs, tag = 'smem constant byte address 0x4 - core index']
  #allocation1 [shape = 'u32[144,128]{1,0:T(1,128)}', space=vmem, size = 0x12000, scoped, tag = 'internal scratch']
  #allocation2 [shape = 'f32[1,1]{1,0:T(1,128)}', space=vmem, size = 0x200, scoped, tag = 'scratch operand']
  %s0 = inlined_call_operand.vmem [shape: f32[250,32], index: 0, kind: input, shape index: {}]
  %s1 = inlined_call_operand.vmem [shape: s32[336,1], index: 1, kind: input, shape index: {}]
  %s2 = inlined_call_operand.hbm [shape: f32[16,128], index: 2, kind: output, shape index: {}]
  %s3 = sld [smem:[#allocation0]]
  $region49: #{tpu_custom_call.1} parent=0
    _
  %s5 = ssub.s32 1, %s3
  %s6 = scalar_select 0, %s5, %s3
  $region1: #{tpu_custom_call.1} parent=0
    #allocation3 [shape = 'u8[8192]{0}', space=vmem, size = 0x2000, scoped, tag = 'output window, operand 0']
    #allocation4 [shape = 's32[2]{0}', space=sflag, size = 0x8, scoped, tag = 'scoped memory for tpu_custom_call.1']
    %7 = vsyncpa [#allocation4], 0
    %s8 = scalar_lea.sflag [#allocation4], 1
    %9 = vsyncpa %s8, 0
    loop: start=0, step=1, limit=8
    $region2: #{tpu_custom_call.1} parent=1 // loop_pre_header
      _
    $region3: #{tpu_custom_call.1} parent=1 // loop_header
      %s11 = sphi 0, %s15
      %p12 = scmp.ge.s32.totalorder %s11, 8
      %s18 = sphi 0, %s30
      %s19 = sphi 0, %s26
      %s20 = sphi 0, %s18
      %s21 = sphi 0, %s19
      %s22 = sphi 0, %s20
      %s23 = sphi 0, %s21
      %s41 = sphi 0, %s43
      %s44 = sphi 0, %s41
      %s45 = sphi 0, %s44
      %s61 = sphi 0, %s45
      %s71 = sphi 0, %s73
      %s74 = sphi 0, %s71
      %s75 = sphi 0, %s74
      %s91 = sphi 0, %s75
      %s97 = sphi 0, %s99
      %s100 = sphi 0, %s97
      %s101 = sphi 0, %s100
      %s117 = sphi 0, %s101
    $region4: #{tpu_custom_call.1} parent=1 // loop_header_branch
      %14 = sbr.rel (%p12) target = $region8
    $region5: #{tpu_custom_call.1} parent=1 // loop_body
      %s16 = ssub.s32 %s11, 1
      %s17 = ssub.s32 %s11, 2
      %s24 = sadd.s32 1, %s19
      %p25 = scmp.ge.s32.totalorder %s24, 3
      %s26 = scalar_select %p25, 0, %s24
      %s27 = sadd.s32 1, %s18
      %s28 = scalar_select %p25, %s27, %s18
      %p29 = scmp.ge.s32.totalorder %s28, 2
      %s30 = scalar_select %p29, 0, %s28
      %s31 = smul.u32 %s18, 3
      %s32 = sadd.s32 %s31, %s19
      %p33 = scmp.lt.s32.totalorder %s32, 4
      %s34 = scalar_select %p33, %s32, 4
      %s35 = smul.u32 %s30, 3
      %s36 = sadd.s32 %s35, %s26
      %p37 = scmp.lt.s32.totalorder %s36, 4
      %s38 = scalar_select %p37, %s36, 4
      %s39 = ssub.s32 %s34, %s38
      %p40 = scmp.eq.s32.totalorder %s39, 0
      %s42 = sadd.s32 %s41, 1
      %s43 = scalar_select %p40, %s41, %s42
      %p46 = pneg %p40
      %p47 = scmp.eq.s32.totalorder %s11, 5
      %p48 = por %p46, %p47
      %p49 = scmp.ne.s32.totalorder %s41, %s44
      %p50 = scmp.eq.s32.totalorder %s11, 0
      %p51 = por %p49, %p50
      %p52 = scmp.ne.s32.totalorder %s41, %s44
      %p53 = scmp.eq.s32.totalorder %s16, 5
      %p54 = por %p52, %p53
      %p55 = scmp.ne.s32.totalorder %s44, %s45
      %p56 = scmp.eq.s32.totalorder %s16, 0
      %p57 = por %p55, %p56
      %p58 = scmp.ne.s32.totalorder %s44, %s45
      %p59 = scmp.eq.s32.totalorder %s17, 5
      %p60 = por %p58, %p59
      %p62 = scmp.ne.s32.totalorder %s45, %s61
      %p63 = scmp.eq.s32.totalorder %s17, 0
      %p64 = por %p62, %p63
      %s65 = smul.u32 %s18, 3
      %s66 = sadd.s32 %s65, %s19
      %s67 = smul.u32 %s30, 3
      %s68 = sadd.s32 %s67, %s26
      %s69 = ssub.s32 %s66, %s68
      %p70 = scmp.eq.s32.totalorder %s69, 0
      %s72 = sadd.s32 %s71, 1
      %s73 = scalar_select %p70, %s71, %s72
      %p76 = pneg %p70
      %p77 = scmp.eq.s32.totalorder %s11, 5
      %p78 = por %p76, %p77
      %p79 = scmp.ne.s32.totalorder %s71, %s74
      %p80 = scmp.eq.s32.totalorder %s11, 0
      %p81 = por %p79, %p80
      %p82 = scmp.ne.s32.totalorder %s71, %s74
      %p83 = scmp.eq.s32.totalorder %s16, 5
      %p84 = por %p82, %p83
      %p85 = scmp.ne.s32.totalorder %s74, %s75
      %p86 = scmp.eq.s32.totalorder %s16, 0
      %p87 = por %p85, %p86
      %p88 = scmp.ne.s32.totalorder %s74, %s75
      %p89 = scmp.eq.s32.totalorder %s17, 5
      %p90 = por %p88, %p89
      %p92 = scmp.ne.s32.totalorder %s75, %s91
      %p93 = scmp.eq.s32.totalorder %s17, 0
      %p94 = por %p92, %p93
      %s95 = ssub.s32 %s18, %s30
      %p96 = scmp.eq.s32.totalorder %s95, 0
      %s98 = sadd.s32 %s97, 1
      %s99 = scalar_select %p96, %s97, %s98
      %p102 = pneg %p96
      %p103 = scmp.eq.s32.totalorder %s11, 5
      %p104 = por %p102, %p103
      %p105 = scmp.ne.s32.totalorder %s97, %s100
      %p106 = scmp.eq.s32.totalorder %s11, 0
      %p107 = por %p105, %p106
      %p108 = scmp.ne.s32.totalorder %s97, %s100
      %p109 = scmp.eq.s32.totalorder %s16, 5
      %p110 = por %p108, %p109
      %p111 = scmp.ne.s32.totalorder %s100, %s101
      %p112 = scmp.eq.s32.totalorder %s16, 0
      %p113 = por %p111, %p112
      %p114 = scmp.ne.s32.totalorder %s100, %s101
      %p115 = scmp.eq.s32.totalorder %s17, 5
      %p116 = por %p114, %p115
      %p118 = scmp.ne.s32.totalorder %s101, %s117
      %p119 = scmp.eq.s32.totalorder %s17, 0
      %p120 = por %p118, %p119
      %p121 = scmp.le.s32.totalorder 1, %s11
      %p122 = scmp.lt.s32.totalorder %s11, 7
      %p123 = pnand %p121, %p122
      %p124 = pneg %p123
      // Predicated region
      $region9: #{tpu_custom_call.1} parent=5 // pred_check
        _
      $region10: #{tpu_custom_call.1} parent=5 // pred_check_branch
        %126 = sbr.rel (%p123) target = $region12
      $region11: #{tpu_custom_call.1} parent=5 // pred_region
        %s127 = ssub.s32 %s11, 1
      $region12: #{tpu_custom_call.1} parent=5 // pred_fallthru
        _
      %p128 = scmp.lt.s32.totalorder %s11, 6
      // Predicated region
      $region13: #{tpu_custom_call.1} parent=5 // pred_check
        %p129 = pneg %p128
      $region14: #{tpu_custom_call.1} parent=5 // pred_check_branch
        %131 = sbr.rel (%p129) target = $region16
      $region15: #{tpu_custom_call.1} parent=5 // pred_region
        // Predicated region
        $region17: #{tpu_custom_call.1} parent=15 // pred_check
          %p132 = pneg %p51
        $region18: #{tpu_custom_call.1} parent=15 // pred_check_branch
          %134 = sbr.rel (%p132) target = $region20
        $region19: #{tpu_custom_call.1} parent=15 // pred_region
          %s135 = smul.u32 %s18, 3
          %s136 = sadd.s32 %s135, %s19
          %p137 = scmp.lt.s32.totalorder %s136, 4
          %s138 = scalar_select %p137, %s136, 4
          %s139 = smul.u32 7, %s138
          %s140 = ssub.s32 32, %s139
          %p141 = scmp.lt.s32.totalorder %s140, 7
          %s142 = scalar_select %p141, %s140, 7
          %s143 = smul.u32 128, %s142
          %p144 = scmp.lt.s32.totalorder %s139, 31
          %s145 = scalar_select %p144, %s139, 31
          %s146 = smul.addr %s145, 8
          %s147 = scalar_lea.vmem %s0, %s146
          %s148 = smul.u32 %s18, 3
          %s149 = sadd.s32 %s148, %s19
          %p150 = scmp.lt.s32.totalorder %s149, 4
          %s151 = scalar_select %p150, %s149, 4
          %s152 = smul.u32 7, %s151
          %s153 = ssub.s32 32, %s152
          %p154 = scmp.lt.s32.totalorder %s153, 7
          %s155 = scalar_select %p154, %s153, 7
          %s156 = smul.u32 128, %s155
        $region20: #{tpu_custom_call.1} parent=15 // pred_fallthru
          _
        // Predicated region
        $region21: #{tpu_custom_call.1} parent=15 // pred_check
          %p157 = pneg %p81
        $region22: #{tpu_custom_call.1} parent=15 // pred_check_branch
          %159 = sbr.rel (%p157) target = $region24
        $region23: #{tpu_custom_call.1} parent=15 // pred_region
          %s160 = smul.u32 %s18, 3
          %s161 = sadd.s32 %s160, %s19
          %s162 = smul.u32 7, %s161
          %p163 = scmp.lt.s32.totalorder %s162, 41
          %s164 = scalar_select %p163, %s162, 41
          %s165 = smul.addr %s164, 8
          %s166 = scalar_lea.vmem %s1, %s165
          %s167 = smul.u32 %s18, 3
          %s168 = sadd.s32 %s167, %s19
          %s169 = smul.u32 7, %s168
        $region24: #{tpu_custom_call.1} parent=15 // pred_fallthru
          _
      $region16: #{tpu_custom_call.1} parent=5 // pred_fallthru
        _
      %p170 = scmp.le.s32.totalorder 1, %s11
      %p171 = scmp.lt.s32.totalorder %s11, 7
      %p172 = pnand %p170, %p171
      %p173 = pneg %p172
      // Predicated region
      $region25: #{tpu_custom_call.1} parent=5 // pred_check
        _
      $region26: #{tpu_custom_call.1} parent=5 // pred_check_branch
        %175 = sbr.rel (%p172) target = $region28
      $region27: #{tpu_custom_call.1} parent=5 // pred_region
        %s176 = ssub.s32 %s11, 1
        %s177 = smul.u32 %s20, 3
        %s178 = sadd.s32 %s177, %s21
        %p179 = scmp.lt.s32.totalorder %s178, 4
        %s180 = scalar_select %p179, %s178, 4
        %s181 = smul.u32 7, %s180
        %s182 = ssub.s32 32, %s181
        %p183 = scmp.lt.s32.totalorder %s182, 7
        %s184 = scalar_select %p183, %s182, 7
        %s185 = smul.u32 128, %s184
        %p186 = scmp.lt.s32.totalorder %s181, 31
        %s187 = scalar_select %p186, %s181, 31
        %s188 = smul.addr %s187, 8
        %s189 = scalar_lea.vmem %s0, %s188
        %p190 = pneg %p57
        %p191 = pneg %p54
        %s192 = smul.u32 %s20, 3
        %s193 = sadd.s32 %s192, %s21
        %s194 = smul.u32 7, %s193
        %p195 = scmp.lt.s32.totalorder %s194, 41
        %s196 = scalar_select %p195, %s194, 41
        %s197 = smul.addr %s196, 8
        %s198 = scalar_lea.vmem %s1, %s197
        %p199 = pneg %p87
        %p200 = pneg %p84
        %p201 = pneg %p113
        %p202 = pneg %p110
        %s203 = sand.u32 %s100, 1
        %s204 = scalar_lea.sflag [#allocation4], %s203
        %s205 = sand.u32 %s100, 1
        %s206 = smul.addr %s205, 8
        %s207 = scalar_lea.vmem [#allocation3], %s206
        %s208 = smul.u32 %s20, 3
        %s209 = sadd.s32 %s208, %s21
        %p210 = scmp.lt.s32.totalorder %s209, 4
        %s211 = scalar_select %p210, %s209, 4
        %s212 = smul.u32 7, %s211
        %s213 = ssub.s32 32, %s212
        %p214 = scmp.lt.s32.totalorder %s213, 7
        %s215 = scalar_select %p214, %s213, 7
        %s216 = smul.u32 128, %s215
        %p217 = scmp.lt.s32.totalorder %s212, 31
        %s218 = scalar_select %p217, %s212, 31
        %s219 = smul.addr %s218, 8
        %s220 = scalar_lea.vmem %s0, %s219
        %s221 = smul.u32 %s20, 3
        %s222 = sadd.s32 %s221, %s21
        %p223 = scmp.lt.s32.totalorder %s222, 4
        %s224 = scalar_select %p223, %s222, 4
        %s225 = smul.u32 7, %s224
        %s226 = ssub.s32 32, %s225
        %p227 = scmp.lt.s32.totalorder %s226, 7
        %s228 = scalar_select %p227, %s226, 7
        %s229 = smul.u32 128, %s228
        %s230 = smul.u32 %s20, 3
        %s231 = sadd.s32 %s230, %s21
        %s232 = smul.u32 7, %s231
        %p233 = scmp.lt.s32.totalorder %s232, 41
        %s234 = scalar_select %p233, %s232, 41
        %s235 = smul.addr %s234, 8
        %s236 = scalar_lea.vmem %s1, %s235
        %s237 = smul.u32 %s20, 3
        %s238 = sadd.s32 %s237, %s21
        %s239 = smul.u32 7, %s238
        %p240 = scmp.eq.s32.totalorder %s21, 0
        // Predicated region
        $region29: #{tpu_custom_call.1} parent=27 // pred_check
          %p241 = pneg %p240
        $region30: #{tpu_custom_call.1} parent=27 // pred_check_branch
          %243 = sbr.rel (%p241) target = $region32
        $region31: #{tpu_custom_call.1} parent=27 // pred_region
          %vm244 = vcmask 0
          %245 = vst.msk [vmem:[#allocation2] sm:$0x1] %vm244, 0.0
        $region32: #{tpu_custom_call.1} parent=27 // pred_fallthru
          _
        %v246 = vld [vmem:[%s220] sm:$0xff]
        %v247 = vld [vmem:[%s220 + $0x8] sm:$0xff]
        %v248 = vld [vmem:[%s220 + $0x10] sm:$0xff]
        %v249 = vld [vmem:[%s220 + $0x18] sm:$0xff]
        %v250 = vld [vmem:[%s220 + $0x20] sm:$0xff]
        %v251 = vld [vmem:[%s220 + $0x28] sm:$0xff]
        %v252 = vld [vmem:[%s220 + $0x30] sm:$0xff]
        %v253 = vld [vmem:[%s236] sm:$0xff]
        %v254 = vld [vmem:[%s236 + $0x8] sm:$0xff]
        %v255 = vld [vmem:[%s236 + $0x10] sm:$0xff]
        %v256 = vld [vmem:[%s236 + $0x18] sm:$0xff]
        %v257 = vld [vmem:[%s236 + $0x20] sm:$0xff]
        %v258 = vld [vmem:[%s236 + $0x28] sm:$0xff]
        %v259 = vld [vmem:[%s236 + $0x30] sm:$0xff]
        %v260 = vlaneseq
        %v261 = vand.u32 %v260, 127
        %v262 = vlog2.pop %v246
        %v263 = vmul.f32 %v262, 0.6931472
        %v264 = vlog2.pop %v247
        %v265 = vmul.f32 %v264, 0.6931472
        %v266 = vlog2.pop %v248
        %v267 = vmul.f32 %v266, 0.6931472
        %v268 = vlog2.pop %v249
        %v269 = vmul.f32 %v268, 0.6931472
        %v270 = vlog2.pop %v250
        %v271 = vmul.f32 %v270, 0.6931472
        %v272 = vlog2.pop %v251
        %v273 = vmul.f32 %v272, 0.6931472
        %v274 = vlog2.pop %v252
        %v275 = vmul.f32 %v274, 0.6931472
        %v276 = vsub.f32 1.0, %v246
        %v277 = vsub.f32 1.0, %v247
        %v278 = vsub.f32 1.0, %v248
        %v279 = vsub.f32 1.0, %v249
        %v280 = vsub.f32 1.0, %v250
        %v281 = vsub.f32 1.0, %v251
        %v282 = vsub.f32 1.0, %v252
        %v283 = vmul.f32 %v276, %v276
        %v284 = vmul.f32 %v277, %v277
        %v285 = vmul.f32 %v278, %v278
        %v286 = vmul.f32 %v279, %v279
        %v287 = vmul.f32 %v280, %v280
        %v288 = vmul.f32 %v281, %v281
        %v289 = vmul.f32 %v282, %v282
        %v290 = vmul.f32 %v283, %v263
        %v291 = vmul.f32 %v284, %v265
        %v292 = vmul.f32 %v285, %v267
        %v293 = vmul.f32 %v286, %v269
        %v294 = vmul.f32 %v287, %v271
        %v295 = vmul.f32 %v288, %v273
        %v296 = vmul.f32 %v289, %v275
        %297 = vset.pattern.permute.xlu0 0
        %298 = vperm.xlu0 %297, %v253
        %v299 = vpop.permute.xlu0 %298
        %300 = vset.pattern.permute.xlu0 0
        %301 = vperm.xlu0 %300, %v254
        %v302 = vpop.permute.xlu0 %301
        %303 = vset.pattern.permute.xlu0 0
        %304 = vperm.xlu0 %303, %v255
        %v305 = vpop.permute.xlu0 %304
        %306 = vset.pattern.permute.xlu0 0
        %307 = vperm.xlu0 %306, %v256
        %v308 = vpop.permute.xlu0 %307
        %309 = vset.pattern.permute.xlu0 0
        %310 = vperm.xlu0 %309, %v257
        %v311 = vpop.permute.xlu0 %310
        %312 = vset.pattern.permute.xlu0 0
        %313 = vperm.xlu0 %312, %v258
        %v314 = vpop.permute.xlu0 %313
        %315 = vset.pattern.permute.xlu0 0
        %316 = vperm.xlu0 %315, %v259
        %v317 = vpop.permute.xlu0 %316
        %vm318 = vcmp.eq.s32.totalorder %v261, %v299
        %vm319 = vcmp.eq.s32.totalorder %v261, %v302
        %vm320 = vcmp.eq.s32.totalorder %v261, %v305
        %vm321 = vcmp.eq.s32.totalorder %v261, %v308
        %vm322 = vcmp.eq.s32.totalorder %v261, %v311
        %vm323 = vcmp.eq.s32.totalorder %v261, %v314
        %vm324 = vcmp.eq.s32.totalorder %v261, %v317
        %v325 = vsel %vm318, %v290, 0.0
        %v326 = vsel %vm319, %v291, 0.0
        %v327 = vsel %vm320, %v292, 0.0
        %v328 = vsel %vm321, %v293, 0.0
        %v329 = vsel %vm322, %v294, 0.0
        %v330 = vsel %vm323, %v295, 0.0
        %v331 = vsel %vm324, %v296, 0.0
        %v332 = vld [vmem:[#allocation2] sm:$0x1]
        %vm333 = vcmask 261120
        %v334 = vsel %vm333, %v325, 0.0
        %v335 = vsel %vm333, %v326, 0.0
        %v336 = vadd.f32 %v334, %v335
        %v337 = vsel %vm333, %v327, 0.0
        %v338 = vadd.f32 %v336, %v337
        %v339 = vsel %vm333, %v328, 0.0
        %v340 = vadd.f32 %v338, %v339
        %v341 = vsel %vm333, %v329, 0.0
        %v342 = vadd.f32 %v340, %v341
        %v343 = vsel %vm333, %v330, 0.0
        %v344 = vadd.f32 %v342, %v343
        %v345 = vsel %vm333, %v331, 0.0
        %v346 = vadd.f32 %v344, %v345
        %347 = vadd.xlane.f32.xlu0 %v346
        %v348 = vpop.xlane.xlu0 %347
        %v349 = vrot.slane %v348, 4
        %v350 = vadd.f32 %v348, %v349
        %v351 = vrot.slane %v350, 2
        %v352 = vadd.f32 %v350, %v351
        %v353 = vrot.slane %v352, 1
        %v354 = vadd.f32 %v352, %v353
        %s355 = vtos %v354
        %v356 = vstv %s355
        %v357 = vadd.f32 %v332, %v356
        %vm358 = vcmask 0
        %359 = vst.msk [vmem:[#allocation2] sm:$0x1] %vm358, %v357
        %p360 = scmp.eq.s32.totalorder %s21, 2
        // Predicated region
        $region33: #{tpu_custom_call.1} parent=27 // pred_check
          %p361 = pneg %p360
        $region34: #{tpu_custom_call.1} parent=27 // pred_check_branch
          %363 = sbr.rel (%p361) target = $region36
        $region35: #{tpu_custom_call.1} parent=27 // pred_region
          %v364 = vld [vmem:[#allocation2] sm:$0x1]
          %v366 = vlaneseq
          %v367 = vshrl.u32 %v366, 7
          %v368 = vsub.s32 0, %v367
          %v369 = vrot.slane %v364, %v368
          %370 = vset.pattern.permute.xlu0 0
          %371 = vperm.xlu0 %370, %v369
          %v372 = vpop.permute.xlu0 %371
          %374 = vst [vmem:[%s207] sm:$0xff] %v372
        $region36: #{tpu_custom_call.1} parent=27 // pred_fallthru
          _
        %s375 = sand.u32 %s100, 1
        %s376 = scalar_lea.sflag [#allocation4], %s375
        %s377 = sand.u32 %s100, 1
        %s378 = smul.addr %s377, 8
        %s379 = scalar_lea.vmem [#allocation3], %s378
        // Predicated region
        $region37: #{tpu_custom_call.1} parent=27 // pred_check
          %p380 = pneg %p110
        $region38: #{tpu_custom_call.1} parent=27 // pred_check_branch
          %382 = sbr.rel (%p380) target = $region40
        $region39: #{tpu_custom_call.1} parent=27 // pred_region
          %s384 = ssub.s32 128, 128
          %385 = vsyncadd %s376, %s384
          %s386 = smul.addr %s20, 128
          %s387 = scalar_lea.hbm %s2, %s386
          %s389 = sshll.u32 %s379, 4
          %s390 = int_to_ptr.vmem [resolvable:$true] %s389
          %392 = dma.vmem_to_hbm [thread:$0]  %s390, 128, %s387, %s376
        $region40: #{tpu_custom_call.1} parent=27 // pred_fallthru
          _
      $region28: #{tpu_custom_call.1} parent=5 // pred_fallthru
        _
      %p393 = scmp.le.s32.totalorder 2, %s11
      // Predicated region
      $region41: #{tpu_custom_call.1} parent=5 // pred_check
        %p394 = pneg %p393
      $region42: #{tpu_custom_call.1} parent=5 // pred_check_branch
        %396 = sbr.rel (%p394) target = $region44
      $region43: #{tpu_custom_call.1} parent=5 // pred_region
        %s397 = ssub.s32 %s11, 2
        // Predicated region
        $region45: #{tpu_custom_call.1} parent=43 // pred_check
          %p398 = pneg %p116
        $region46: #{tpu_custom_call.1} parent=43 // pred_check_branch
          %400 = sbr.rel (%p398) target = $region48
        $region47: #{tpu_custom_call.1} parent=43 // pred_region
          %s401 = sand.u32 %s101, 1
          %s402 = scalar_lea.sflag [#allocation4], %s401
          %s403 = sand.u32 %s101, 1
          %s404 = smul.addr %s403, 8
          %s405 = scalar_lea.vmem [#allocation3], %s404
          %406 = dma.done %s402, 128
        $region48: #{tpu_custom_call.1} parent=43 // pred_fallthru
          _
      $region44: #{tpu_custom_call.1} parent=5 // pred_fallthru
        _
    $region6: #{tpu_custom_call.1} parent=1 // loop_footer
      %s15 = sadd.s32 1, %s11
    $region7: #{tpu_custom_call.1} parent=1 // loop_footer_branch
      %10 = sbr.rel target = $region3
    $region8: #{tpu_custom_call.1} parent=1 // loop_exit
      _
    %407 = vsyncpa [#allocation4], 1
    %s408 = scalar_lea.sflag [#allocation4], 1
    %409 = vsyncpa %s408, 1

</llo_original>
